<compile_context>
chip_gen: v7x
topology: tpu7x:2x2x1
jax: 0.10.0
libtpu: 0.0.40
codegen_flags: <defaults>
</compile_context>

<pallas_src>
import functools
import math

import jax
import jax.numpy as jnp
from jax.experimental import pallas as pl
from jax.experimental.pallas import tpu as pltpu

LANE = 128
MAX_TILE_ROWS = 1024  # (n+1) double-buffered f32 tiles of (1024,128) stay << 64 MiB (v7x)


def _round_up(a, b):
    return ((a + b - 1) // b) * b


def _make_sum_kernel(n, use_weight):
    """Kernel: o = x0 + sum_i w[i] * x[i+1]  (w statically all-ones if unweighted)."""

    def kernel(w_ref, *refs):
        # w_ref: SMEM (n-1,) float32 scalar weights
        # refs:  n input VMEM tiles (TR, 128) followed by the output tile
        x_refs = refs[:n]
        o_ref = refs[n]
        acc = x_refs[0][...].astype(jnp.float32)
        for i in range(1, n):
            xi = x_refs[i][...].astype(jnp.float32)
            if use_weight:
                acc = acc + xi * w_ref[i - 1]   # scalar-from-SMEM * vreg (VPU)
            else:
                acc = acc + xi
        o_ref[...] = acc.astype(o_ref.dtype)

    return kernel


@functools.partial(jax.jit, static_argnames=("use_weight",))
def sum_forward(xs, w_param, *, use_weight):
    """Equivalent of Sum.forward(x): y = x[0] (+ sum x[i+1]*2*sigmoid(w[i]))."""
    xs = tuple(xs)
    n = len(xs)
    shape = xs[0].shape
    dtype = xs[0].dtype
    total = math.prod(shape)

    # --- fold the parameter -> scalar weights (done once, outside the kernel) ---
    if use_weight:
        w = (2.0 * jax.nn.sigmoid(w_param)).astype(jnp.float32)
    else:
        w = jnp.ones((n - 1,), jnp.float32)   # statically unused in the kernel

    # --- lane-dense (rows, 128) layout; pick the largest tile that fits ---
    R = _round_up(total, LANE) // LANE
    if R <= MAX_TILE_ROWS:
        TR = _round_up(max(R, 8), 8)          # single grid step
    else:
        TR = MAX_TILE_ROWS
    R_pad = _round_up(R, TR)
    padded = R_pad * LANE

    def to_slab(x):
        xf = x.reshape(-1)
        if padded != total:
            xf = jnp.pad(xf, (0, padded - total))
        return xf.reshape(R_pad, LANE)

    slabs = [to_slab(x) for x in xs]

    block = pl.BlockSpec((TR, LANE), lambda i: (i, 0))
    grid = (R_pad // TR,)

    itemsize = xs[0].dtype.itemsize
    flops = (2 if use_weight else 1) * (n - 1) * total

    out = pl.pallas_call(
        _make_sum_kernel(n, use_weight),
        out_shape=jax.ShapeDtypeStruct((R_pad, LANE), dtype),
        grid_spec=pltpu.PrefetchScalarGridSpec(
            num_scalar_prefetch=0,
            grid=grid,
            in_specs=[pl.BlockSpec(memory_space=pltpu.MemorySpace.SMEM)]  # weights
                     + [block] * n,                                       # inputs
            out_specs=block,
        ),
        compiler_params=pltpu.CompilerParams(
            dimension_semantics=("parallel",),       # shards rows across v7x's 2 TCs
            vmem_limit_bytes=32 * 1024 * 1024,
        ),
        cost_estimate=pl.CostEstimate(
            flops=flops,
            transcendentals=0,
            bytes_accessed=(n + 1) * total * itemsize,
        ),
    )(w, *slabs)

    out_flat = out.reshape(-1)
    if padded != total:
        out_flat = out_flat[:total]
    return out_flat.reshape(shape)


# ---------------------------------------------------------------------------
# Pure-JAX reference (mirrors the PyTorch module exactly)
# ---------------------------------------------------------------------------
def sum_forward_ref(xs, w_param, use_weight):
    y = xs[0]
    if use_weight:
        w = jax.nn.sigmoid(w_param) * 2.0
        for i in range(len(xs) - 1):
            y = y + xs[i + 1] * w[i]
    else:
        for i in range(len(xs) - 1):
            y = y + xs[i + 1]
    return y


if __name__ == "__main__":
    # Sum(n=3, weight=True): 3 input feature maps of shape (2, 4, 16, 16)
    n = 3
    N, C, H, W = 2, 4, 16, 16

    key = jax.random.PRNGKey(0)
    keys = jax.random.split(key, n)
    xs = tuple(jax.random.normal(keys[i], (N, C, H, W), dtype=jnp.float32)
               for i in range(n))

    # nn.Parameter init from the module: -arange(1., n) / 2
    w_param = -(jnp.arange(1.0, n, dtype=jnp.float32)) / 2.0
    # TODO(synk): only the forward pass is implemented; the learnable-weight
    # gradient path of nn.Parameter is out of scope for this kernel.

    # Weighted branch
    out_w = sum_forward(xs, w_param, use_weight=True)
    out_w = jax.block_until_ready(out_w)
    ref_w = sum_forward_ref(xs, w_param, True)
    assert out_w.shape == (N, C, H, W), out_w.shape
    assert jnp.allclose(out_w, ref_w, atol=1e-5, rtol=1e-5), (
        float(jnp.max(jnp.abs(out_w - ref_w))))

    # Unweighted branch
    out_u = sum_forward(xs, w_param, use_weight=False)
    out_u = jax.block_until_ready(out_u)
    ref_u = sum_forward_ref(xs, w_param, False)
    assert jnp.allclose(out_u, ref_u, atol=1e-5, rtol=1e-5), (
        float(jnp.max(jnp.abs(out_u - ref_u))))

    print("KERNEL_OK")
</pallas_src>

<mosaic_0001>
module attributes {stable_mosaic.version = 11 : i64} {
  func.func @kernel(%arg0: i32, %arg1: memref<2xf32, #tpu.memory_space<smem>>, %arg2: memref<16x128xf32, #tpu.memory_space<vmem>>, %arg3: memref<16x128xf32, #tpu.memory_space<vmem>>, %arg4: memref<16x128xf32, #tpu.memory_space<vmem>>, %arg5: memref<16x128xf32, #tpu.memory_space<vmem>>) attributes {dimension_semantics = [#tpu.dimension_semantics<parallel>], iteration_bounds = array<i64: 1>, scalar_prefetch = 0 : i64, scratch_operands = 0 : i64, tpu.core_type = #tpu.core_type<tc>, window_params = [{transform_indices = @transform_0, window_bounds = array<i64: 2>}, {transform_indices = @transform_1, window_bounds = array<i64: 16, 128>}, {transform_indices = @transform_2, window_bounds = array<i64: 16, 128>}, {transform_indices = @transform_3, window_bounds = array<i64: 16, 128>}, {transform_indices = @transform_4, window_bounds = array<i64: 16, 128>}]} {
    %c0 = arith.constant 0 : index
    %c0_0 = arith.constant 0 : index
    %0 = vector.load %arg2[%c0, %c0_0] : memref<16x128xf32, #tpu.memory_space<vmem>>, vector<16x128xf32>
    %c0_1 = arith.constant 0 : index
    %c0_2 = arith.constant 0 : index
    %1 = vector.load %arg3[%c0_1, %c0_2] : memref<16x128xf32, #tpu.memory_space<vmem>>, vector<16x128xf32>
    %c0_3 = arith.constant 0 : index
    %2 = memref.load %arg1[%c0_3] : memref<2xf32, #tpu.memory_space<smem>>
    %3 = vector.broadcast %2 : f32 to vector<16x128xf32>
    %4 = arith.mulf %1, %3 : vector<16x128xf32>
    %5 = arith.addf %0, %4 : vector<16x128xf32>
    %c0_4 = arith.constant 0 : index
    %c0_5 = arith.constant 0 : index
    %6 = vector.load %arg4[%c0_4, %c0_5] : memref<16x128xf32, #tpu.memory_space<vmem>>, vector<16x128xf32>
    %c1 = arith.constant 1 : index
    %7 = memref.load %arg1[%c1] : memref<2xf32, #tpu.memory_space<smem>>
    %8 = vector.broadcast %7 : f32 to vector<16x128xf32>
    %9 = arith.mulf %6, %8 : vector<16x128xf32>
    %10 = arith.addf %5, %9 : vector<16x128xf32>
    %c0_6 = arith.constant 0 : index
    %c0_7 = arith.constant 0 : index
    %11 = vector.load %arg5[%c0_6, %c0_7] : memref<16x128xf32, #tpu.memory_space<vmem>>, vector<16x128xf32>
    tpu.vector_store %arg5[%c0_6, %c0_7], %10 {strides = array<i32>} : memref<16x128xf32, #tpu.memory_space<vmem>>, vector<16x128xf32>,
    return
  }
  func.func @transform_0(%arg0: i32) -> i32 {
    %c0_i32 = arith.constant 0 : i32
    %c0_i32_0 = arith.constant 0 : i32
    return %c0_i32 : i32
  }
  func.func @transform_1(%arg0: i32) -> (i32, i32) {
    %c0_i32 = arith.constant 0 : i32
    %c0_i32_0 = arith.constant 0 : i32
    return %arg0, %c0_i32 : i32, i32
  }
  func.func @transform_2(%arg0: i32) -> (i32, i32) {
    %c0_i32 = arith.constant 0 : i32
    %c0_i32_0 = arith.constant 0 : i32
    return %arg0, %c0_i32 : i32, i32
  }
  func.func @transform_3(%arg0: i32) -> (i32, i32) {
    %c0_i32 = arith.constant 0 : i32
    %c0_i32_0 = arith.constant 0 : i32
    return %arg0, %c0_i32 : i32, i32
  }
  func.func @transform_4(%arg0: i32) -> (i32, i32) {
    %c0_i32 = arith.constant 0 : i32
    %c0_i32_0 = arith.constant 0 : i32
    return %arg0, %c0_i32 : i32, i32
  }
}

</mosaic_0001>

<llo_original>
// kernel: sum_forward.1
$region0: #{sum_forward.1}
  #allocation0 [shape = 'u32[]', space=smem, size = 0x4, offset = 0x4, fixed_abs, tag = 'smem constant byte address 0x4 - core index']
  #allocation1 [shape = 'u32[144,128]{1,0:T(1,128)}', space=vmem, size = 0x12000, scoped, tag = 'internal scratch']
  %s0 = inlined_call_operand.vmem [shape: f32[2], index: 0, kind: input, shape index: {}]
  %s1 = inlined_call_operand.vmem [shape: f32[16,128], index: 1, kind: input, shape index: {}]
  %s2 = inlined_call_operand.vmem [shape: f32[16,128], index: 2, kind: input, shape index: {}]
  %s3 = inlined_call_operand.vmem [shape: f32[16,128], index: 3, kind: input, shape index: {}]
  %s4 = inlined_call_operand.vmem [shape: f32[16,128], index: 4, kind: output, shape index: {}]
  %s5 = sld [smem:[#allocation0]]
  $region30: #{sum_forward.1} parent=0
    _
  %s7 = ssub.s32 1, %s5
  %s8 = scalar_select 0, %s7, %s5
  $region1: #{sum_forward.1} parent=0
    #allocation2 [shape = 'u8[512]{0}', space=smem, size = 0x200, scoped, tag = 'input window, operand 0, single buffered']
    #allocation3 [shape = 's32[1]{0}', space=sflag, size = 0x4, scoped, tag = 'scoped memory for sum_forward.1']
    %9 = vsyncpa [#allocation3], 0
    // Predicated region
    $region2: #{sum_forward.1} parent=1 // pred_check
      _
    $region3: #{sum_forward.1} parent=1 // pred_check_branch
      %11 = sbr.rel (0) target = $region5
    $region4: #{sum_forward.1} parent=1 // pred_region
      %s13 = ssub.s32 16, 16
      %14 = vsyncadd [#allocation3], %s13
      %s16 = sshll.u32 %s0, 4
      %s17 = int_to_ptr.vmem [resolvable:$true] %s16
      %19 = dma.vmem_to_smem %s17, 16, [#allocation2], [#allocation3]
    $region5: #{sum_forward.1} parent=1 // pred_fallthru
      _
    // Predicated region
    $region6: #{sum_forward.1} parent=1 // pred_check
      _
    $region7: #{sum_forward.1} parent=1 // pred_check_branch
      %21 = sbr.rel (0) target = $region9
    $region8: #{sum_forward.1} parent=1 // pred_region
      _
    $region9: #{sum_forward.1} parent=1 // pred_fallthru
      _
    // Predicated region
    $region10: #{sum_forward.1} parent=1 // pred_check
      _
    $region11: #{sum_forward.1} parent=1 // pred_check_branch
      %23 = sbr.rel (0) target = $region13
    $region12: #{sum_forward.1} parent=1 // pred_region
      _
    $region13: #{sum_forward.1} parent=1 // pred_fallthru
      _
    // Predicated region
    $region14: #{sum_forward.1} parent=1 // pred_check
      _
    $region15: #{sum_forward.1} parent=1 // pred_check_branch
      %25 = sbr.rel (0) target = $region17
    $region16: #{sum_forward.1} parent=1 // pred_region
      _
    $region17: #{sum_forward.1} parent=1 // pred_fallthru
      _
    // Predicated region
    $region18: #{sum_forward.1} parent=1 // pred_check
      _
    $region19: #{sum_forward.1} parent=1 // pred_check_branch
      %27 = sbr.rel (0) target = $region21
    $region20: #{sum_forward.1} parent=1 // pred_region
      %28 = dma.done [#allocation3], 16
    $region21: #{sum_forward.1} parent=1 // pred_fallthru
      _
    %29 = sfence
    %v30 = vld [vmem:[%s1] sm:$0xff]
    %v31 = vld [vmem:[%s1 + $0x8] sm:$0xff]
    %v32 = vld [vmem:[%s2] sm:$0xff]
    %v33 = vld [vmem:[%s2 + $0x8] sm:$0xff]
    %s34 = sld [smem:[#allocation2]]
    %v35 = vstv %s34
    %v36 = vmul.f32 %v32, %v35
    %v37 = vmul.f32 %v33, %v35
    %v38 = vadd.f32 %v30, %v36
    %v39 = vadd.f32 %v31, %v37
    %v40 = vld [vmem:[%s3] sm:$0xff]
    %v41 = vld [vmem:[%s3 + $0x8] sm:$0xff]
    %s42 = sld [smem:[#allocation2 + $0x1]]
    %v43 = vstv %s42
    %v44 = vmul.f32 %v40, %v43
    %v45 = vmul.f32 %v41, %v43
    %v46 = vadd.f32 %v38, %v44
    %v47 = vadd.f32 %v39, %v45
    %48 = vst [vmem:[%s4] sm:$0xff] %v46
    %49 = vst [vmem:[%s4 + $0x8] sm:$0xff] %v47
    // Predicated region
    $region22: #{sum_forward.1} parent=1 // pred_check
      _
    $region23: #{sum_forward.1} parent=1 // pred_check_branch
      %51 = sbr.rel (0) target = $region25
    $region24: #{sum_forward.1} parent=1 // pred_region
      _
    $region25: #{sum_forward.1} parent=1 // pred_fallthru
      _
    // Predicated region
    $region26: #{sum_forward.1} parent=1 // pred_check
      _
    $region27: #{sum_forward.1} parent=1 // pred_check_branch
      %53 = sbr.rel (0) target = $region29
    $region28: #{sum_forward.1} parent=1 // pred_region
      _
    $region29: #{sum_forward.1} parent=1 // pred_fallthru
      _
    %54 = vsyncpa [#allocation3], 1

</llo_original>
